<compile_context>
chip_gen: v7x
topology: tpu7x:2x2x1
jax: 0.10.0
libtpu: 0.0.40
codegen_flags: <defaults>
</compile_context>

<pallas_src>
import jax
import jax.numpy as jnp
from jax.experimental import pallas as pl
from jax.experimental.pallas import tpu as pltpu

LANES = 128           # vreg lane width: last dim of every block
MAX_TILE_ROWS = 2048  # 2048*128*4B = 1 MiB/block; ~4 MiB VMEM double-buffered (in+out)


def linear_kernel(params_ref, x_ref, o_ref):
    # params_ref: SMEM (2,) float32 = [w, b]
    # x_ref, o_ref: VMEM (tile_rows, 128) lane-dense tiles
    w = params_ref[0]
    b = params_ref[1]
    # Pure VPU broadcast multiply-add in f32; cast only on store.
    o_ref[...] = (x_ref[...].astype(jnp.float32) * w + b).astype(o_ref.dtype)


def _choose_tile_rows(rows: int) -> int:
    """Pick a block height (rows of 128 lanes) for the given row count."""
    if rows <= 16:
        return rows  # full-extent block (allowed even if not a multiple of 8)
    # Aim for >= 2 grid steps (v7x dual TensorCore) while capping at ~1 MiB/block.
    half = -(-rows // 2)                 # cdiv(rows, 2)
    half_aligned = ((half + 15) // 16) * 16   # 16-row alignment (safe for bf16 too)
    return min(MAX_TILE_ROWS, half_aligned)


def linear_forward(x, weight, bias):
    """x: (B, 1), weight: (1, 1), bias: (1,) -> (B, 1). Matches nn.Linear(1, 1)."""
    B = x.shape[0]
    dtype = x.dtype

    w_f32 = weight.reshape(()).astype(jnp.float32)
    b_f32 = bias.reshape(()).astype(jnp.float32)

    # 128-aligned prefix goes through the kernel; the <128-element tail is
    # negligible work and is handled with plain jnp (no padding copies).
    B_main = (B // LANES) * LANES

    if B_main == 0:
        # Entire batch is smaller than one lane row; trivial jnp fallback.
        return (x.astype(jnp.float32) * w_f32 + b_f32).astype(dtype)

    params = jnp.stack([w_f32, b_f32])  # (2,) float32 -> SMEM

    rows = B_main // LANES
    tile_rows = _choose_tile_rows(rows)
    grid = (pl.cdiv(rows, tile_rows),)  # last block may be ragged; Pallas masks OOB writes

    x_main = x if B_main == B else x[:B_main]
    x2d = x_main.reshape((rows, LANES))  # contiguous -> layout-only reshape

    y2d = pl.pallas_call(
        linear_kernel,
        out_shape=jax.ShapeDtypeStruct((rows, LANES), dtype),
        grid=grid,
        in_specs=[
            pl.BlockSpec(memory_space=pltpu.MemorySpace.SMEM),   # params, whole array
            pl.BlockSpec((tile_rows, LANES), lambda i: (i, 0)),  # lane-dense input tile
        ],
        out_specs=pl.BlockSpec((tile_rows, LANES), lambda i: (i, 0)),
        compiler_params=pltpu.CompilerParams(
            dimension_semantics=("parallel",),  # megacore sharding on v7x
        ),
    )(params, x2d)

    y_main = y2d.reshape((B_main, 1))
    if B_main == B:
        return y_main  # no tail, no extra HBM pass

    y_tail = (x[B_main:].astype(jnp.float32) * w_f32 + b_f32).astype(dtype)
    return jnp.concatenate([y_main, y_tail], axis=0)


if __name__ == "__main__":
    key = jax.random.PRNGKey(0)
    k_x, k_w, k_b, k_x2, k_x3, k_x4 = jax.random.split(key, 6)

    # Deterministic parameter init mimicking torch.nn.Linear(1, 1):
    # uniform in [-1/sqrt(in_features), 1/sqrt(in_features)] = [-1, 1].
    weight = jax.random.uniform(k_w, (1, 1), jnp.float32, minval=-1.0, maxval=1.0)
    bias = jax.random.uniform(k_b, (1,), jnp.float32, minval=-1.0, maxval=1.0)

    def ref(x):
        return x @ weight.T + bias

    # Aligned batch: pure kernel path, no wrapper copies.
    x = jax.random.normal(k_x, (512, 1), jnp.float32)
    y = jax.block_until_ready(linear_forward(x, weight, bias))
    assert y.shape == (512, 1)
    assert jnp.allclose(y, ref(x), atol=1e-6), "mismatch vs reference (batch=512)"

    # Ragged batch: aligned prefix through the kernel + jnp tail.
    x2 = jax.random.normal(k_x2, (1000, 1), jnp.float32)
    y2 = jax.block_until_ready(linear_forward(x2, weight, bias))
    assert y2.shape == (1000, 1)
    assert jnp.allclose(y2, ref(x2), atol=1e-6), "mismatch vs reference (batch=1000)"

    # Tiny batch (< 128): jnp fallback path.
    x3 = jax.random.normal(k_x3, (8, 1), jnp.float32)
    y3 = jax.block_until_ready(linear_forward(x3, weight, bias))
    assert y3.shape == (8, 1)
    assert jnp.allclose(y3, ref(x3), atol=1e-6), "mismatch vs reference (batch=8)"

    # Larger batch: multi-step grid with a ragged last block.
    x4 = jax.random.normal(k_x4, (100_000, 1), jnp.float32)
    y4 = jax.block_until_ready(linear_forward(x4, weight, bias))
    assert y4.shape == (100_000, 1)
    assert jnp.allclose(y4, ref(x4), atol=1e-6), "mismatch vs reference (batch=100000)"

    print("KERNEL_OK")
</pallas_src>

<mosaic_0001>
module attributes {stable_mosaic.version = 11 : i64} {
  func.func @linear_kernel(%arg0: i32, %arg1: memref<2xf32, #tpu.memory_space<smem>>, %arg2: memref<4x128xf32, #tpu.memory_space<vmem>>, %arg3: memref<4x128xf32, #tpu.memory_space<vmem>>) attributes {dimension_semantics = [#tpu.dimension_semantics<parallel>], iteration_bounds = array<i64: 1>, scalar_prefetch = 0 : i64, scratch_operands = 0 : i64, tpu.core_type = #tpu.core_type<tc>, window_params = [{transform_indices = @transform_0, window_bounds = array<i64: 2>}, {transform_indices = @transform_1, window_bounds = array<i64: 4, 128>}, {transform_indices = @transform_2, window_bounds = array<i64: 4, 128>}]} {
    %c0 = arith.constant 0 : index
    %0 = memref.load %arg1[%c0] : memref<2xf32, #tpu.memory_space<smem>>
    %c1 = arith.constant 1 : index
    %1 = memref.load %arg1[%c1] : memref<2xf32, #tpu.memory_space<smem>>
    %c0_0 = arith.constant 0 : index
    %c0_1 = arith.constant 0 : index
    %2 = vector.load %arg2[%c0_0, %c0_1] : memref<4x128xf32, #tpu.memory_space<vmem>>, vector<4x128xf32>
    %3 = vector.broadcast %0 : f32 to vector<4x128xf32>
    %4 = arith.mulf %2, %3 : vector<4x128xf32>
    %5 = vector.broadcast %1 : f32 to vector<4x128xf32>
    %6 = arith.addf %4, %5 : vector<4x128xf32>
    %c0_2 = arith.constant 0 : index
    %c0_3 = arith.constant 0 : index
    %7 = vector.load %arg3[%c0_2, %c0_3] : memref<4x128xf32, #tpu.memory_space<vmem>>, vector<4x128xf32>
    tpu.vector_store %arg3[%c0_2, %c0_3], %6 {strides = array<i32>} : memref<4x128xf32, #tpu.memory_space<vmem>>, vector<4x128xf32>,
    return
  }
  func.func @transform_0(%arg0: i32) -> i32 {
    %c0_i32 = arith.constant 0 : i32
    %c0_i32_0 = arith.constant 0 : i32
    return %c0_i32 : i32
  }
  func.func @transform_1(%arg0: i32) -> (i32, i32) {
    %c0_i32 = arith.constant 0 : i32
    %c0_i32_0 = arith.constant 0 : i32
    return %arg0, %c0_i32 : i32, i32
  }
  func.func @transform_2(%arg0: i32) -> (i32, i32) {
    %c0_i32 = arith.constant 0 : i32
    %c0_i32_0 = arith.constant 0 : i32
    return %arg0, %c0_i32 : i32, i32
  }
}

</mosaic_0001>

<llo_original>
// kernel: tpu_custom_call.1
$region0: #{tpu_custom_call.1}
  #allocation0 [shape = 'u32[]', space=smem, size = 0x4, offset = 0x4, fixed_abs, tag = 'smem constant byte address 0x4 - core index']
  #allocation1 [shape = 'u32[144,128]{1,0:T(1,128)}', space=vmem, size = 0x12000, scoped, tag = 'internal scratch']
  %s0 = inlined_call_operand.hbm [shape: f32[2], index: 0, kind: input, shape index: {}]
  %s1 = inlined_call_operand.hbm [shape: f32[4,128], index: 1, kind: input, shape index: {}]
  %s2 = inlined_call_operand.hbm [shape: f32[4,128], index: 2, kind: output, shape index: {}]
  %s3 = sld [smem:[#allocation0]]
  $region26: #{tpu_custom_call.1} parent=0
    _
  %s5 = ssub.s32 1, %s3
  %s6 = scalar_select 0, %s5, %s3
  $region1: #{tpu_custom_call.1} parent=0
    #allocation2 [shape = 'u8[512]{0}', space=smem, size = 0x200, scoped, tag = 'input window, operand 0, single buffered']
    #allocation3 [shape = 's32[1]{0}', space=sflag, size = 0x4, scoped, tag = 'scoped memory for tpu_custom_call.1']
    #allocation4 [shape = 's32[1]{0}', space=sflag, size = 0x4, scoped, tag = 'scoped memory for tpu_custom_call.1']
    #allocation5 [shape = 's32[1]{0}', space=sflag, size = 0x4, scoped, tag = 'scoped memory for tpu_custom_call.1']
    #allocation6 [shape = 'u8[2048]{0}', space=vmem, size = 0x800, scoped, tag = 'input window, operand 1, single buffered']
    #allocation7 [shape = 'u8[2048]{0}', space=vmem, size = 0x800, scoped, tag = 'output window, operand 0, single buffered']
    %7 = vsyncpa [#allocation5], 0
    %8 = vsyncpa [#allocation3], 0
    %9 = vsyncpa [#allocation4], 0
    // Predicated region
    $region2: #{tpu_custom_call.1} parent=1 // pred_check
      _
    $region3: #{tpu_custom_call.1} parent=1 // pred_check_branch
      %11 = sbr.rel (0) target = $region5
    $region4: #{tpu_custom_call.1} parent=1 // pred_region
      %s13 = ssub.s32 16, 16
      %14 = vsyncadd [#allocation5], %s13
      %17 = dma.hbm_to_smem %s0, 16, [#allocation2], [#allocation5]
    $region5: #{tpu_custom_call.1} parent=1 // pred_fallthru
      _
    // Predicated region
    $region6: #{tpu_custom_call.1} parent=1 // pred_check
      _
    $region7: #{tpu_custom_call.1} parent=1 // pred_check_branch
      %19 = sbr.rel (0) target = $region9
    $region8: #{tpu_custom_call.1} parent=1 // pred_region
      %s21 = ssub.s32 64, 64
      %22 = vsyncadd [#allocation3], %s21
      %s24 = sshll.u32 [#allocation6], 4
      %s25 = int_to_ptr.vmem [resolvable:$true] %s24
      %27 = dma.hbm_to_vmem [thread:$0]  %s1, 64, %s25, [#allocation3]
    $region9: #{tpu_custom_call.1} parent=1 // pred_fallthru
      _
    // Predicated region
    $region10: #{tpu_custom_call.1} parent=1 // pred_check
      _
    $region11: #{tpu_custom_call.1} parent=1 // pred_check_branch
      %29 = sbr.rel (0) target = $region13
    $region12: #{tpu_custom_call.1} parent=1 // pred_region
      %30 = dma.done [#allocation5], 16
    $region13: #{tpu_custom_call.1} parent=1 // pred_fallthru
      _
    // Predicated region
    $region14: #{tpu_custom_call.1} parent=1 // pred_check
      _
    $region15: #{tpu_custom_call.1} parent=1 // pred_check_branch
      %32 = sbr.rel (0) target = $region17
    $region16: #{tpu_custom_call.1} parent=1 // pred_region
      %33 = dma.done [#allocation3], 64
    $region17: #{tpu_custom_call.1} parent=1 // pred_fallthru
      _
    %34 = sfence
    %s35 = sld [smem:[#allocation2]]
    %s36 = sld [smem:[#allocation2 + $0x1]]
    %v37 = vld [vmem:[#allocation6] sm:$0xf]
    %v38 = vstv %s35
    %v39 = vmul.f32 %v37, %v38
    %v40 = vstv %s36
    %v41 = vadd.f32 %v39, %v40
    %42 = vst [vmem:[#allocation7] sm:$0xf] %v41
    // Predicated region
    $region18: #{tpu_custom_call.1} parent=1 // pred_check
      _
    $region19: #{tpu_custom_call.1} parent=1 // pred_check_branch
      %44 = sbr.rel (0) target = $region21
    $region20: #{tpu_custom_call.1} parent=1 // pred_region
      %s46 = ssub.s32 64, 64
      %47 = vsyncadd [#allocation4], %s46
      %s49 = sshll.u32 [#allocation7], 4
      %s50 = int_to_ptr.vmem [resolvable:$true] %s49
      %52 = dma.vmem_to_hbm [thread:$0]  %s50, 64, %s2, [#allocation4]
    $region21: #{tpu_custom_call.1} parent=1 // pred_fallthru
      _
    // Predicated region
    $region22: #{tpu_custom_call.1} parent=1 // pred_check
      _
    $region23: #{tpu_custom_call.1} parent=1 // pred_check_branch
      %54 = sbr.rel (0) target = $region25
    $region24: #{tpu_custom_call.1} parent=1 // pred_region
      %55 = dma.done [#allocation4], 64
    $region25: #{tpu_custom_call.1} parent=1 // pred_fallthru
      _
    %56 = vsyncpa [#allocation3], 1
    %57 = vsyncpa [#allocation4], 1
    %58 = vsyncpa [#allocation5], 1

</llo_original>
